<compile_context>
chip_gen: v7x
topology: tpu7x:2x2x1
jax: 0.10.0
libtpu: 0.0.40
codegen_flags: <defaults>
</compile_context>

<pallas_src>
import functools
from dataclasses import dataclass

import numpy as np
import jax
import jax.numpy as jnp
from jax.experimental import pallas as pl
from jax.experimental.pallas import tpu as pltpu

# ----------------------------- GP hyperparameters ----------------------------
SIGMA2 = 1.0          # kernel output scale
LENGTHSCALE = 0.7     # RBF lengthscale
NOISE = 1e-2          # likelihood noise on training kernel diagonal

LANE = 128
SUBLANE = 8


@dataclass
class mean_and_variance:
    mean: jnp.ndarray
    variance: jnp.ndarray


def extract_function_value_for_first_sample(y):
    return y[0, :, :, 0]


def _round_up(a, b):
    return ((a + b - 1) // b) * b


def _choose_lane_tile(nr):
    """Lane tile over test points.  256/512-wide tiles (128-wide runs ~29% of HBM
    roofline vs ~85% at 512); always >= 2 'parallel' steps so a v7x megacore can
    feed both TensorCores; pad the point count up instead of shrinking the tile."""
    tn = 512 if nr > 1024 else 256
    return tn, max(2 * tn, _round_up(nr, tn))


def _bspec(shape, index_map, buffers=None):
    """BlockSpec with optional explicit buffer count (single-buffer grid-invariant
    blocks).  Falls back to a plain BlockSpec on older JAX without pipeline_mode."""
    if buffers is not None:
        try:
            return pl.BlockSpec(shape, index_map, pipeline_mode=pl.Buffered(buffers))
        except (TypeError, AttributeError):
            pass
    return pl.BlockSpec(shape, index_map)


# ------------------- host-side (glue) training-kernel setup ------------------
def _rbf_grad_kernel_matrix(X, sigma2, lengthscale):
    """RBF-with-gradients train/train kernel, task-major flat index s*M + m."""
    M, D = X.shape
    T = D + 1
    lam = 1.0 / (lengthscale ** 2)
    diff = X[:, None, :] - X[None, :, :]            # (M, M, D)
    sq = np.sum(diff ** 2, axis=-1)
    k = sigma2 * np.exp(-0.5 * lam * sq)            # (M, M)
    K = np.zeros((T, M, T, M), dtype=np.float64)
    K[0, :, 0, :] = k
    for j in range(D):
        K[0, :, 1 + j, :] = k * diff[:, :, j] * lam
    for i in range(D):
        K[1 + i, :, 0, :] = -k * diff[:, :, i] * lam
        for j in range(D):
            delta = lam if i == j else 0.0
            K[1 + i, :, 1 + j, :] = k * (delta - diff[:, :, i] * diff[:, :, j] * lam * lam)
    return K.reshape(T * M, T * M)


def make_exact_gp_with_derivatives(X_train, y_train, *, sigma2=SIGMA2,
                                   lengthscale=LENGTHSCALE, noise=NOISE):
    """One-time training glue (numpy): K^-1, alpha, plus padded/aligned device params.

    No Pallas equivalent needed — this is training-time work, not the forward pass.
    """
    X_train = np.asarray(X_train, dtype=np.float64)
    y_train = np.asarray(y_train, dtype=np.float64)
    M, D = X_train.shape
    T = D + 1
    lam = 1.0 / (lengthscale ** 2)

    K = _rbf_grad_kernel_matrix(X_train, sigma2, lengthscale) + noise * np.eye(T * M)
    alpha = np.linalg.solve(K, y_train)            # (T*M,), task-major
    Kinv = np.linalg.inv(K)                        # (T*M, T*M), task-major

    # --- alignment plan ---------------------------------------------------------
    # Pad M to a sublane group so each per-task slab block starts on an 8-row
    # boundary; chunk the K^-1 rows once TM is big enough that a resident block
    # would strain VMEM.  chunk=512 is a multiple of 256 (v6e/v7x MXU tiles) and
    # of 128 (v5e).  Padded rows/cols of K^-1 / alpha are zero => exact results.
    m_pad = _round_up(M, SUBLANE)
    tm = T * m_pad
    chunk = tm if tm <= 1024 else 512
    tm_full = _round_up(tm, chunk)

    # bf16 weights + slab (f32 accumulation in-kernel) only once the matmul is big
    # enough to care about MXU throughput / VMEM footprint; f32 at toy sizes keeps
    # the quadratic-form variance accurate near var ~ 0.
    compute_dtype = jnp.bfloat16 if tm_full >= 512 else jnp.float32

    Kp = np.zeros((tm_full, tm_full), dtype=np.float64)
    ap = np.zeros((tm_full,), dtype=np.float64)
    for s in range(T):
        rs, rd = s * M, s * m_pad
        ap[rd:rd + M] = alpha[rs:rs + M]
        for t in range(T):
            cs, cd = t * M, t * m_pad
            Kp[rd:rd + M, cd:cd + M] = Kinv[rs:rs + M, cs:cs + M]

    Xp = np.zeros((m_pad, D), dtype=np.float64)
    Xp[:M] = X_train
    # Augmented training matrix for the fused distance matmul:
    #   exponent = [lam*z, -0.5*lam*||z||^2, 1] @ [x ; 1 ; -0.5*lam*||x||^2]
    xaug = np.zeros((m_pad, D + 2), dtype=np.float64)
    xaug[:, :D] = lam * Xp
    xaug[:M, D] = -0.5 * lam * np.sum(X_train ** 2, axis=1)
    xaug[:, D + 1] = 1.0

    return dict(
        xaug=jnp.asarray(xaug, dtype=jnp.float32),            # (m_pad, D+2) f32
        w=jnp.asarray(Kp, dtype=compute_dtype),                # (TMf, TMf)
        alpha=jnp.asarray(ap[None, :], dtype=compute_dtype),   # (1, TMf)
        m_pad=m_pad, d=D, chunk=chunk, tm_full=tm_full,
        sigma2=float(sigma2), lam=float(lam), compute_dtype=compute_dtype,
        # kept for the host-side reference check only
        X_train=X_train, alpha_flat=alpha, Kinv=Kinv,
    )


# --------------------------------- Pallas kernel ------------------------------
def _gp_fn_value_kernel(xta_ref, xaug_ref, w_ref, alpha_ref, mean_ref, var_ref,
                        ksf_ref, q_ref, *, sigma2, lam, m, d, chunk, n_chunks,
                        tm_rows, tm_full):
    """Grid = (test-point tile r [parallel], K^-1 row-chunk c [arbitrary]).

    Shapes (TN = lane tile, TMf = padded T*M):
      xta_ref  (d+2, TN)     [x^T ; 1 ; -0.5*lam*||x||^2], lane-dense test points
      xaug_ref (m, d+2)      [lam*z, -0.5*lam*||z||^2, 1] per training point
      w_ref    (chunk, TMf)  row-chunk of padded K^-1
      alpha_ref(1, TMf)      alpha^T (posterior-mean weights)
      mean_ref/var_ref (1, TN)
      ksf_ref  (TMf, TN)     VMEM slab: transposed fn-value/derivative cross-cov
      q_ref    (1, TN) f32   quadratic-form accumulator
    """
    c = pl.program_id(1)

    # -- once per test-point tile: build the Ksf^T slab, zero the accumulator ----
    @pl.when(c == 0)
    def _build_slab():
        xta = xta_ref[...]                                         # (d+2, TN) f32
        xa = xaug_ref[...]                                         # (m, d+2) f32
        xt = xta[0:d, :]                                           # (d, TN)
        # fused squared-distance exponent via one small MXU matmul
        e = jnp.dot(xa, xta, preferred_element_type=jnp.float32)   # (m, TN)
        k = sigma2 * jnp.exp(jnp.minimum(e, 0.0))                  # (m, TN)
        ksf_ref[pl.ds(0, m), :] = k.astype(ksf_ref.dtype)
        for j in range(d):                                         # derivative tasks
            dov = lam * xt[j:j + 1, :] - xa[:, j:j + 1]            # lam*(x_j - z_j)
            ksf_ref[pl.ds((1 + j) * m, m), :] = (k * dov).astype(ksf_ref.dtype)
        if tm_full > tm_rows:                                      # zero chunk padding
            ksf_ref[pl.ds(tm_rows, tm_full - tm_rows), :] = jnp.zeros(
                (tm_full - tm_rows, ksf_ref.shape[1]), ksf_ref.dtype)
        q_ref[...] = jnp.zeros_like(q_ref)

    # -- per K^-1 row-chunk: accumulate the quadratic-form variance term ---------
    ksf = ksf_ref[...]                                             # (TMf, TN)
    r_chunk = jnp.dot(w_ref[...], ksf,
                      preferred_element_type=jnp.float32)          # (chunk, TN) f32
    if n_chunks == 1:
        ksf_chunk = ksf
    else:
        row0 = pl.multiple_of(c * chunk, chunk)
        ksf_chunk = ksf_ref[pl.ds(row0, chunk), :]
    q_ref[...] += jnp.sum(r_chunk * ksf_chunk.astype(jnp.float32),
                          axis=0, keepdims=True)

    # -- last chunk: posterior mean (separate alpha matmul) & variance -----------
    @pl.when(c == n_chunks - 1)
    def _finalize():
        mean_ref[...] = jnp.dot(alpha_ref[...], ksf_ref[...],
                                preferred_element_type=jnp.float32)
        var_ref[...] = jnp.maximum(sigma2 - q_ref[...], 0.0)


def gp_forward_pallas(x_aug_t, params, *, tn):
    """x_aug_t: (D+2, NRP) f32 augmented test matrix.  Returns (1, NRP) mean/var."""
    xaug, w, alpha = params["xaug"], params["w"], params["alpha"]
    m_pad, d = params["m_pad"], params["d"]
    chunk, tm_full = params["chunk"], params["tm_full"]
    sigma2, lam = params["sigma2"], params["lam"]
    slab_dtype = params["compute_dtype"]

    D2, NRP = x_aug_t.shape
    tm_rows = (d + 1) * m_pad
    n_chunks = tm_full // chunk
    assert NRP % tn == 0 and NRP // tn >= 2
    grid = (NRP // tn, n_chunks)

    kern = functools.partial(
        _gp_fn_value_kernel, sigma2=sigma2, lam=lam, m=m_pad, d=d,
        chunk=chunk, n_chunks=n_chunks, tm_rows=tm_rows, tm_full=tm_full)

    itm = np.dtype(slab_dtype).itemsize
    # VMEM budget from the actual buffers (single-buffered resident w vs.
    # double-buffered streamed chunks), with headroom; clamp below every
    # generation's physical/scoped ceiling (v7x large-TM stays inside via chunking).
    w_bytes = chunk * tm_full * itm * (1 if n_chunks == 1 else 2)
    slab_bytes = tm_full * tn * itm
    misc = (2 * D2 * tn * 4 + 4 * tn * 4 + int(xaug.size) * 4
            + 2 * tm_full * itm + tn * 4)
    vmem_limit = int(min(max(1.3 * (w_bytes + slab_bytes + misc) + (8 << 20),
                             32 << 20), 96 << 20))

    flops = (NRP // tn) * (2 * (d + 2) * m_pad * tn                 # distances
                           + n_chunks * 2 * chunk * tm_full * tn    # K^-1 @ Ksf^T
                           + 2 * tm_full * tn                       # alpha @ Ksf^T
                           + 2 * tm_full * tn)                      # q elementwise
    cost = pl.CostEstimate(
        flops=int(flops),
        transcendentals=int(m_pad * NRP),
        bytes_accessed=int((NRP // tn) * chunk * tm_full * itm * n_chunks
                           + int(x_aug_t.size) * 4 + int(xaug.size) * 4
                           + int(alpha.size) * itm + 2 * NRP * 4))

    out_shape = (jax.ShapeDtypeStruct((1, NRP), jnp.float32),
                 jax.ShapeDtypeStruct((1, NRP), jnp.float32))

    mean, var = pl.pallas_call(
        kern,
        out_shape=out_shape,
        grid=grid,
        in_specs=[
            pl.BlockSpec((D2, tn), lambda r, c: (0, r)),               # test tile
            _bspec((m_pad, d + 2), lambda r, c: (0, 0), buffers=1),    # aug. train pts
            _bspec((chunk, tm_full), lambda r, c: (c, 0),              # K^-1 chunk
                   buffers=1 if n_chunks == 1 else None),
            _bspec((1, tm_full), lambda r, c: (0, 0), buffers=1),      # alpha row
        ],
        out_specs=(
            pl.BlockSpec((1, tn), lambda r, c: (0, r)),
            pl.BlockSpec((1, tn), lambda r, c: (0, r)),
        ),
        scratch_shapes=[pltpu.VMEM((tm_full, tn), slab_dtype),         # Ksf^T slab
                        pltpu.VMEM((1, tn), jnp.float32)],             # q accumulator
        compiler_params=pltpu.CompilerParams(
            dimension_semantics=("parallel", "arbitrary"),
            vmem_limit_bytes=vmem_limit),
        cost_estimate=cost,
    )(x_aug_t, xaug, w, alpha)
    return mean, var


# ------------------------------- module wrapper -------------------------------
class GPModelWithDerivativesProjectedToFunctionValues:
    """forward(x) == [0, :, :, 0] projection of the tiled GP-with-derivatives output.

    All tiled batch copies are identical by construction (same hyperparameters and
    training data across the tiled axes) and only task 0 of sample 0 is consumed,
    so the kernel evaluates each distinct test point once (task 0 only) and the
    wrapper re-tiles the result to the projected shape.
    """

    def __init__(self, gp_model, batch_shape_tile=None):
        self.gp_model = gp_model       # params dict from make_exact_gp_with_derivatives
        if batch_shape_tile is None:
            self.tile_shape = (1, 1, 1, 1)
        else:
            self.tile_shape = (batch_shape_tile[0], batch_shape_tile[1], 1, 1)

    def __call__(self, x):
        X0, X1, N, D = x.shape
        B1 = self.tile_shape[1]
        p = self.gp_model
        lam = p["lam"]

        # Fold the surviving batch axis into the lane-dense test-point axis and
        # pad up to the tile (dead lanes are cheaper than extra, narrower steps).
        nr = X1 * N
        tn, nrp = _choose_lane_tile(nr)
        x_rows = jnp.pad(x[0].reshape(nr, D).astype(jnp.float32),
                         ((0, nrp - nr), (0, 0)))                       # (NRP, D)
        xsq = jnp.sum(x_rows * x_rows, axis=1, keepdims=True)           # (NRP, 1)
        x_aug_t = jnp.concatenate(
            [x_rows, jnp.ones((nrp, 1), jnp.float32), -0.5 * lam * xsq],
            axis=1).T                                                    # (D+2, NRP)

        mean_row, var_row = gp_forward_pallas(x_aug_t, p, tn=tn)

        # Re-tile to what extract_function_value_for_first_sample of the tiled
        # output would produce: (B1 * X1, N).
        mean = jnp.tile(mean_row[0, :nr].reshape(X1, N), (B1, 1))
        var = jnp.tile(var_row[0, :nr].reshape(X1, N), (B1, 1))
        return mean_and_variance(mean=mean, variance=var)


# ------------------------------ numpy reference -------------------------------
def _reference_forward(x_tile, X_train, alpha_flat, Kinv, sigma2, lengthscale):
    B0, B1, N, D = x_tile.shape
    M = X_train.shape[0]
    T = D + 1
    lam = 1.0 / (lengthscale ** 2)
    prior = np.array([sigma2] + [sigma2 * lam] * D)
    mean = np.zeros((B0, B1, N, T))
    var = np.zeros((B0, B1, N, T))
    for b0 in range(B0):
        for b1 in range(B1):
            xs = x_tile[b0, b1]
            diff = xs[:, None, :] - X_train[None, :, :]
            sq = np.sum(diff ** 2, -1)
            k = sigma2 * np.exp(-0.5 * lam * sq)
            Ks = np.zeros((N, T, T, M))
            Ks[:, 0, 0, :] = k
            for j in range(D):
                Ks[:, 0, 1 + j, :] = k * diff[:, :, j] * lam
            for i in range(D):
                Ks[:, 1 + i, 0, :] = -k * diff[:, :, i] * lam
                for j in range(D):
                    delta = lam if i == j else 0.0
                    Ks[:, 1 + i, 1 + j, :] = k * (
                        delta - diff[:, :, i] * diff[:, :, j] * lam * lam)
            Ksf = Ks.reshape(N, T, T * M)
            mean[b0, b1] = Ksf @ alpha_flat
            tmp = Ksf @ Kinv
            var[b0, b1] = prior[None, :] - np.sum(tmp * Ksf, axis=-1)
    return mean, var


# ------------------------------------ main ------------------------------------
if __name__ == "__main__":
    key = jax.random.PRNGKey(0)
    D, M, N = 2, 8, 8          # input dims, training points, test points
    T = D + 1
    TILE = (2, 2)              # batch_shape_tile

    k1, k2, k3 = jax.random.split(key, 3)
    X_train = np.asarray(jax.random.normal(k1, (M, D), dtype=jnp.float32),
                         dtype=np.float64)
    y_train = np.asarray(jax.random.normal(k2, (T * M,), dtype=jnp.float32),
                         dtype=np.float64)
    x = jax.random.normal(k3, (1, 1, N, D), dtype=jnp.float32)

    params = make_exact_gp_with_derivatives(X_train, y_train)
    model = GPModelWithDerivativesProjectedToFunctionValues(params, batch_shape_tile=TILE)

    out = model(x)
    jax.block_until_ready(out.mean)
    jax.block_until_ready(out.variance)

    # Sanity check against a pure-numpy reference of the full tiled GP.
    x_tile_np = np.tile(np.asarray(x, dtype=np.float64), (TILE[0], TILE[1], 1, 1))
    ref_mean, ref_var = _reference_forward(
        x_tile_np, params["X_train"], params["alpha_flat"], params["Kinv"],
        SIGMA2, LENGTHSCALE)
    np.testing.assert_allclose(np.asarray(out.mean), ref_mean[0, :, :, 0],
                               rtol=5e-3, atol=5e-3)
    np.testing.assert_allclose(np.asarray(out.variance), ref_var[0, :, :, 0],
                               rtol=5e-3, atol=5e-3)

    print("KERNEL_OK")
</pallas_src>

<mosaic_0001>
module attributes {stable_mosaic.version = 11 : i64} {
  func.func @_gp_fn_value_kernel(%arg0: i32, %arg1: i32, %arg2: memref<4x256xf32, #tpu.memory_space<vmem>>, %arg3: memref<8x4xf32, #tpu.memory_space<vmem>>, %arg4: memref<24x24xf32, #tpu.memory_space<vmem>>, %arg5: memref<1x24xf32, #tpu.memory_space<vmem>>, %arg6: memref<1x256xf32, #tpu.memory_space<vmem>>, %arg7: memref<1x256xf32, #tpu.memory_space<vmem>>, %arg8: memref<24x256xf32, #tpu.memory_space<vmem>>, %arg9: memref<1x256xf32, #tpu.memory_space<vmem>>) attributes {dimension_semantics = [#tpu.dimension_semantics<parallel>, #tpu.dimension_semantics<arbitrary>], iteration_bounds = array<i64: 2, 1>, scalar_prefetch = 0 : i64, scratch_operands = 2 : i64, tpu.core_type = #tpu.core_type<tc>, window_params = [{transform_indices = @transform_0, window_bounds = array<i64: 4, 256>}, {pipeline_mode = #tpu.pipeline_mode<synchronous>, transform_indices = @transform_1, window_bounds = array<i64: 8, 4>}, {pipeline_mode = #tpu.pipeline_mode<synchronous>, transform_indices = @transform_2, window_bounds = array<i64: 24, 24>}, {pipeline_mode = #tpu.pipeline_mode<synchronous>, transform_indices = @transform_3, window_bounds = array<i64: 1, 24>}, {transform_indices = @transform_4, window_bounds = array<i64: 1, 256>}, {transform_indices = @transform_5, window_bounds = array<i64: 1, 256>}]} {
    %c0_i32 = arith.constant 0 : i32
    %0 = arith.cmpi eq, %arg1, %c0_i32 : i32
    %1 = arith.extui %0 : i1 to i32
    %c0_i32_0 = arith.constant 0 : i32
    %2 = arith.cmpi ne, %1, %c0_i32_0 : i32
    scf.if %2 {
      %c0_11 = arith.constant 0 : index
      %c0_12 = arith.constant 0 : index
      %15 = vector.load %arg2[%c0_11, %c0_12] : memref<4x256xf32, #tpu.memory_space<vmem>>, vector<4x256xf32>
      %c0_13 = arith.constant 0 : index
      %c0_14 = arith.constant 0 : index
      %16 = vector.load %arg3[%c0_13, %c0_14] : memref<8x4xf32, #tpu.memory_space<vmem>>, vector<8x4xf32>
      %17 = vector.extract_strided_slice %15 {offsets = [0, 0], sizes = [2, 256], strides = [1, 1]} : vector<4x256xf32> to vector<2x256xf32>
      %cst_15 = arith.constant dense<0.000000e+00> : vector<8x256xf32>
      %18 = tpu.matmul %16, %15, %cst_15 {dimension_numbers = #tpu.dot_dimension_numbers<[1], [0], [0], [1], [0, 0, 1, 1], [], []>} : vector<8x4xf32>, vector<4x256xf32>, vector<8x256xf32> -> vector<8x256xf32>
      %cst_16 = arith.constant 0.000000e+00 : f32
      %19 = vector.broadcast %cst_16 : f32 to vector<8x256xf32>
      %20 = arith.minimumf %18, %19 : vector<8x256xf32>
      %21 = math.exp %20 : vector<8x256xf32>
      %cst_17 = arith.constant 1.000000e+00 : f32
      %22 = vector.broadcast %cst_17 : f32 to vector<8x256xf32>
      %23 = arith.mulf %22, %21 : vector<8x256xf32>
      %c0_18 = arith.constant 0 : index
      %c0_19 = arith.constant 0 : index
      %24 = vector.load %arg8[%c0_18, %c0_19] : memref<24x256xf32, #tpu.memory_space<vmem>>, vector<8x256xf32>
      tpu.vector_store %arg8[%c0_18, %c0_19], %23 {strides = array<i32>} : memref<24x256xf32, #tpu.memory_space<vmem>>, vector<8x256xf32>,
      %25 = vector.extract_strided_slice %17 {offsets = [0, 0], sizes = [1, 256], strides = [1, 1]} : vector<2x256xf32> to vector<1x256xf32>
      %cst_20 = arith.constant 2.04081631 : f32
      %26 = vector.broadcast %cst_20 : f32 to vector<1x256xf32>
      %27 = arith.mulf %26, %25 : vector<1x256xf32>
      %28 = vector.extract_strided_slice %16 {offsets = [0, 0], sizes = [8, 1], strides = [1, 1]} : vector<8x4xf32> to vector<8x1xf32>
      %29 = vector.broadcast %27 : vector<1x256xf32> to vector<8x256xf32>
      %30 = vector.broadcast %28 : vector<8x1xf32> to vector<8x256xf32>
      %31 = arith.subf %29, %30 : vector<8x256xf32>
      %32 = arith.mulf %23, %31 : vector<8x256xf32>
      %c8 = arith.constant 8 : index
      %c0_21 = arith.constant 0 : index
      %33 = vector.load %arg8[%c8, %c0_21] : memref<24x256xf32, #tpu.memory_space<vmem>>, vector<8x256xf32>
      tpu.vector_store %arg8[%c8, %c0_21], %32 {strides = array<i32>} : memref<24x256xf32, #tpu.memory_space<vmem>>, vector<8x256xf32>,
      %34 = vector.extract_strided_slice %17 {offsets = [1, 0], sizes = [1, 256], strides = [1, 1]} : vector<2x256xf32> to vector<1x256xf32>
      %cst_22 = arith.constant 2.04081631 : f32
      %35 = vector.broadcast %cst_22 : f32 to vector<1x256xf32>
      %36 = arith.mulf %35, %34 : vector<1x256xf32>
      %37 = vector.extract_strided_slice %16 {offsets = [0, 1], sizes = [8, 1], strides = [1, 1]} : vector<8x4xf32> to vector<8x1xf32>
      %38 = vector.broadcast %36 : vector<1x256xf32> to vector<8x256xf32>
      %39 = vector.broadcast %37 : vector<8x1xf32> to vector<8x256xf32>
      %40 = arith.subf %38, %39 : vector<8x256xf32>
      %41 = arith.mulf %23, %40 : vector<8x256xf32>
      %c16 = arith.constant 16 : index
      %c0_23 = arith.constant 0 : index
      %42 = vector.load %arg8[%c16, %c0_23] : memref<24x256xf32, #tpu.memory_space<vmem>>, vector<8x256xf32>
      tpu.vector_store %arg8[%c16, %c0_23], %41 {strides = array<i32>} : memref<24x256xf32, #tpu.memory_space<vmem>>, vector<8x256xf32>,
      %cst_24 = arith.constant 0.000000e+00 : f32
      %43 = vector.broadcast %cst_24 : f32 to vector<1x256xf32>
      %c0_25 = arith.constant 0 : index
      %c0_26 = arith.constant 0 : index
      %44 = vector.load %arg9[%c0_25, %c0_26] : memref<1x256xf32, #tpu.memory_space<vmem>>, vector<1x256xf32>
      tpu.vector_store %arg9[%c0_25, %c0_26], %43 {strides = array<i32>} : memref<1x256xf32, #tpu.memory_space<vmem>>, vector<1x256xf32>,
    } else {
    }
    %c0 = arith.constant 0 : index
    %c0_1 = arith.constant 0 : index
    %3 = vector.load %arg8[%c0, %c0_1] : memref<24x256xf32, #tpu.memory_space<vmem>>, vector<24x256xf32>
    %c0_2 = arith.constant 0 : index
    %c0_3 = arith.constant 0 : index
    %4 = vector.load %arg4[%c0_2, %c0_3] : memref<24x24xf32, #tpu.memory_space<vmem>>, vector<24x24xf32>
    %cst = arith.constant dense<0.000000e+00> : vector<24x256xf32>
    %5 = tpu.matmul %4, %3, %cst {dimension_numbers = #tpu.dot_dimension_numbers<[1], [0], [0], [1], [0, 0, 1, 1], [], []>} : vector<24x24xf32>, vector<24x256xf32>, vector<24x256xf32> -> vector<24x256xf32>
    %c0_4 = arith.constant 0 : index
    %c0_5 = arith.constant 0 : index
    %6 = vector.load %arg9[%c0_4, %c0_5] : memref<1x256xf32, #tpu.memory_space<vmem>>, vector<1x256xf32>
    %7 = arith.mulf %5, %3 : vector<24x256xf32>
    %cst_6 = arith.constant dense<0.000000e+00> : vector<256xf32>
    %8 = vector.multi_reduction <add>, %7, %cst_6 [0] : vector<24x256xf32> to vector<256xf32>
    %9 = vector.shape_cast %8 : vector<256xf32> to vector<1x256xf32>
    %10 = arith.addf %6, %9 : vector<1x256xf32>
    %c0_7 = arith.constant 0 : index
    %c0_8 = arith.constant 0 : index
    %11 = vector.load %arg9[%c0_7, %c0_8] : memref<1x256xf32, #tpu.memory_space<vmem>>, vector<1x256xf32>
    tpu.vector_store %arg9[%c0_7, %c0_8], %10 {strides = array<i32>} : memref<1x256xf32, #tpu.memory_space<vmem>>, vector<1x256xf32>,
    %c0_i32_9 = arith.constant 0 : i32
    %12 = arith.cmpi eq, %arg1, %c0_i32_9 : i32
    %13 = arith.extui %12 : i1 to i32
    %c0_i32_10 = arith.constant 0 : i32
    %14 = arith.cmpi ne, %13, %c0_i32_10 : i32
    scf.if %14 {
      %c0_11 = arith.constant 0 : index
      %c0_12 = arith.constant 0 : index
      %15 = vector.load %arg5[%c0_11, %c0_12] : memref<1x24xf32, #tpu.memory_space<vmem>>, vector<1x24xf32>
      %c0_13 = arith.constant 0 : index
      %c0_14 = arith.constant 0 : index
      %16 = vector.load %arg8[%c0_13, %c0_14] : memref<24x256xf32, #tpu.memory_space<vmem>>, vector<24x256xf32>
      %cst_15 = arith.constant dense<0.000000e+00> : vector<1x256xf32>
      %17 = tpu.matmul %15, %16, %cst_15 {dimension_numbers = #tpu.dot_dimension_numbers<[1], [0], [0], [1], [0, 0, 1, 1], [], []>} : vector<1x24xf32>, vector<24x256xf32>, vector<1x256xf32> -> vector<1x256xf32>
      %c0_16 = arith.constant 0 : index
      %c0_17 = arith.constant 0 : index
      %18 = vector.load %arg6[%c0_16, %c0_17] : memref<1x256xf32, #tpu.memory_space<vmem>>, vector<1x256xf32>
      tpu.vector_store %arg6[%c0_16, %c0_17], %17 {strides = array<i32>} : memref<1x256xf32, #tpu.memory_space<vmem>>, vector<1x256xf32>,
      %c0_18 = arith.constant 0 : index
      %c0_19 = arith.constant 0 : index
      %19 = vector.load %arg9[%c0_18, %c0_19] : memref<1x256xf32, #tpu.memory_space<vmem>>, vector<1x256xf32>
      %cst_20 = arith.constant 1.000000e+00 : f32
      %20 = vector.broadcast %cst_20 : f32 to vector<1x256xf32>
      %21 = arith.subf %20, %19 : vector<1x256xf32>
      %cst_21 = arith.constant 0.000000e+00 : f32
      %22 = vector.broadcast %cst_21 : f32 to vector<1x256xf32>
      %23 = arith.maximumf %21, %22 : vector<1x256xf32>
      %c0_22 = arith.constant 0 : index
      %c0_23 = arith.constant 0 : index
      %24 = vector.load %arg7[%c0_22, %c0_23] : memref<1x256xf32, #tpu.memory_space<vmem>>, vector<1x256xf32>
      tpu.vector_store %arg7[%c0_22, %c0_23], %23 {strides = array<i32>} : memref<1x256xf32, #tpu.memory_space<vmem>>, vector<1x256xf32>,
    } else {
    }
    return
  }
  func.func @transform_0(%arg0: i32, %arg1: i32) -> (i32, i32) {
    %c0_i32 = arith.constant 0 : i32
    %c0_i32_0 = arith.constant 0 : i32
    return %c0_i32, %arg0 : i32, i32
  }
  func.func @transform_1(%arg0: i32, %arg1: i32) -> (i32, i32) {
    %c0_i32 = arith.constant 0 : i32
    %c0_i32_0 = arith.constant 0 : i32
    %c0_i32_1 = arith.constant 0 : i32
    return %c0_i32, %c0_i32_0 : i32, i32
  }
  func.func @transform_2(%arg0: i32, %arg1: i32) -> (i32, i32) {
    %c0_i32 = arith.constant 0 : i32
    %c0_i32_0 = arith.constant 0 : i32
    return %arg1, %c0_i32 : i32, i32
  }
  func.func @transform_3(%arg0: i32, %arg1: i32) -> (i32, i32) {
    %c0_i32 = arith.constant 0 : i32
    %c0_i32_0 = arith.constant 0 : i32
    %c0_i32_1 = arith.constant 0 : i32
    return %c0_i32, %c0_i32_0 : i32, i32
  }
  func.func @transform_4(%arg0: i32, %arg1: i32) -> (i32, i32) {
    %c0_i32 = arith.constant 0 : i32
    %c0_i32_0 = arith.constant 0 : i32
    return %c0_i32, %arg0 : i32, i32
  }
  func.func @transform_5(%arg0: i32, %arg1: i32) -> (i32, i32) {
    %c0_i32 = arith.constant 0 : i32
    %c0_i32_0 = arith.constant 0 : i32
    return %c0_i32, %arg0 : i32, i32
  }
}

</mosaic_0001>

<llo_original>
// kernel: tpu_custom_call.1
$region0: #{tpu_custom_call.1}
  #allocation0 [shape = 'u32[]', space=smem, size = 0x4, offset = 0x4, fixed_abs, tag = 'smem constant byte address 0x4 - core index']
  #allocation1 [shape = 'u32[144,128]{1,0:T(1,128)}', space=vmem, size = 0x12000, scoped, tag = 'internal scratch']
  #allocation2 [shape = 'f32[24,256]{1,0:T(8,128)}', space=vmem, size = 0x6000, scoped, tag = 'scratch operand']
  #allocation3 [shape = 'f32[1,256]{1,0:T(1,128)}', space=vmem, size = 0x400, scoped, tag = 'scratch operand']
  %s0 = inlined_call_operand.hbm [shape: f32[4,512], index: 0, kind: input, shape index: {}]
  %s1 = inlined_call_operand.vmem [shape: f32[8,4], index: 1, kind: input, shape index: {}]
  %s2 = inlined_call_operand.hbm [shape: f32[24,24], index: 2, kind: input, shape index: {}]
  %s3 = inlined_call_operand.vmem [shape: f32[1,24], index: 3, kind: input, shape index: {}]
  %s4 = inlined_call_operand.hbm [shape: f32[1,512], index: 4, kind: output, shape index: {0}]
  %s5 = inlined_call_operand.hbm [shape: f32[1,512], index: 5, kind: output, shape index: {1}]
  %6 = xla_tuple %s4, %s5
  %s7 = sld [smem:[#allocation0]]
  $region73: #{tpu_custom_call.1} parent=0
    _
  %s9 = ssub.s32 1, %s7
  %s10 = scalar_select 0, %s9, %s7
  $region1: #{tpu_custom_call.1} parent=0
    #allocation4 [shape = 'u8[8192]{0}', space=vmem, size = 0x2000, scoped, tag = 'input window, operand 0']
    #allocation5 [shape = 's32[2]{0}', space=sflag, size = 0x8, scoped, tag = 'scoped memory for tpu_custom_call.1']
    #allocation6 [shape = 's32[2]{0}', space=sflag, size = 0x8, scoped, tag = 'scoped memory for tpu_custom_call.1']
    #allocation7 [shape = 'u8[12288]{0}', space=vmem, size = 0x3000, scoped, tag = 'input window, operand 2, single buffered']
    #allocation8 [shape = 's32[1]{0}', space=sflag, size = 0x4, scoped, tag = 'scoped memory for tpu_custom_call.1']
    #allocation9 [shape = 'u8[2048]{0}', space=vmem, size = 0x800, scoped, tag = 'output window, operand 0']
    #allocation10 [shape = 'u8[2048]{0}', space=vmem, size = 0x800, scoped, tag = 'output window, operand 1']
    #allocation11 [shape = 's32[2]{0}', space=sflag, size = 0x8, scoped, tag = 'scoped memory for tpu_custom_call.1']
    %11 = vsyncpa [#allocation5], 0
    %s12 = scalar_lea.sflag [#allocation5], 1
    %13 = vsyncpa %s12, 0
    %14 = vsyncpa [#allocation8], 0
    %15 = vsyncpa [#allocation6], 0
    %s16 = scalar_lea.sflag [#allocation6], 1
    %17 = vsyncpa %s16, 0
    %18 = vsyncpa [#allocation11], 0
    %s19 = scalar_lea.sflag [#allocation11], 1
    %20 = vsyncpa %s19, 0
    loop: start=0, step=1, limit=4
    $region2: #{tpu_custom_call.1} parent=1 // loop_pre_header
      _
    $region3: #{tpu_custom_call.1} parent=1 // loop_header
      %s22 = sphi 0, %s26
      %p23 = scmp.ge.s32.totalorder %s22, 4
      %s29 = sphi 0, %s41
      %s30 = sphi 0, %s37
      %s31 = sphi 0, %s29
      %s32 = sphi 0, %s30
      %s33 = sphi 0, %s31
      %s34 = sphi 0, %s32
      %s44 = sphi 0, %s46
      %s47 = sphi 0, %s44
      %s48 = sphi 0, %s47
      %s64 = sphi 0, %s48
      %s68 = sphi 0, %s68
      %s70 = sphi 0, %s68
      %s71 = sphi 0, %s70
      %s85 = sphi 0, %s71
      %s91 = sphi 0, %s93
      %s94 = sphi 0, %s91
      %s95 = sphi 0, %s94
      %s111 = sphi 0, %s95
      %s115 = sphi 0, %s115
      %s117 = sphi 0, %s115
      %s118 = sphi 0, %s117
      %s132 = sphi 0, %s118
      %s138 = sphi 0, %s140
      %s141 = sphi 0, %s138
      %s142 = sphi 0, %s141
      %s158 = sphi 0, %s142
      %s164 = sphi 0, %s166
      %s167 = sphi 0, %s164
      %s168 = sphi 0, %s167
      %s184 = sphi 0, %s168
    $region4: #{tpu_custom_call.1} parent=1 // loop_header_branch
      %25 = sbr.rel (%p23) target = $region8
    $region5: #{tpu_custom_call.1} parent=1 // loop_body
      %s27 = ssub.s32 %s22, 1
      %s28 = ssub.s32 %s22, 2
      %s35 = sadd.s32 1, %s30
      %p36 = scmp.ge.s32.totalorder %s35, 1
      %s37 = scalar_select %p36, 0, %s35
      %s38 = sadd.s32 1, %s29
      %s39 = scalar_select %p36, %s38, %s29
      %p40 = scmp.ge.s32.totalorder %s39, 2
      %s41 = scalar_select %p40, 0, %s39
      %s42 = ssub.s32 %s29, %s41
      %p43 = scmp.eq.s32.totalorder %s42, 0
      %s45 = sadd.s32 %s44, 1
      %s46 = scalar_select %p43, %s44, %s45
      %p49 = pneg %p43
      %p50 = scmp.eq.s32.totalorder %s22, 1
      %p51 = por %p49, %p50
      %p52 = scmp.ne.s32.totalorder %s44, %s47
      %p53 = scmp.eq.s32.totalorder %s22, 0
      %p54 = por %p52, %p53
      %p55 = scmp.ne.s32.totalorder %s44, %s47
      %p56 = scmp.eq.s32.totalorder %s27, 1
      %p57 = por %p55, %p56
      %p58 = scmp.ne.s32.totalorder %s47, %s48
      %p59 = scmp.eq.s32.totalorder %s27, 0
      %p60 = por %p58, %p59
      %p61 = scmp.ne.s32.totalorder %s47, %s48
      %p62 = scmp.eq.s32.totalorder %s28, 1
      %p63 = por %p61, %p62
      %p65 = scmp.ne.s32.totalorder %s48, %s64
      %p66 = scmp.eq.s32.totalorder %s28, 0
      %p67 = por %p65, %p66
      %s69 = sadd.s32 %s68, 1
      %p72 = scmp.eq.s32.totalorder %s22, 1
      %p73 = scmp.ne.s32.totalorder %s68, %s70
      %p74 = scmp.eq.s32.totalorder %s22, 0
      %p75 = por %p73, %p74
      %p76 = scmp.ne.s32.totalorder %s68, %s70
      %p77 = scmp.eq.s32.totalorder %s27, 1
      %p78 = por %p76, %p77
      %p79 = scmp.ne.s32.totalorder %s70, %s71
      %p80 = scmp.eq.s32.totalorder %s27, 0
      %p81 = por %p79, %p80
      %p82 = scmp.ne.s32.totalorder %s70, %s71
      %p83 = scmp.eq.s32.totalorder %s28, 1
      %p84 = por %p82, %p83
      %p86 = scmp.ne.s32.totalorder %s71, %s85
      %p87 = scmp.eq.s32.totalorder %s28, 0
      %p88 = por %p86, %p87
      %s89 = ssub.s32 %s30, %s37
      %p90 = scmp.eq.s32.totalorder %s89, 0
      %s92 = sadd.s32 %s91, 1
      %s93 = scalar_select %p90, %s91, %s92
      %p96 = pneg %p90
      %p97 = scmp.eq.s32.totalorder %s22, 1
      %p98 = por %p96, %p97
      %p99 = scmp.ne.s32.totalorder %s91, %s94
      %p100 = scmp.eq.s32.totalorder %s22, 0
      %p101 = por %p99, %p100
      %p102 = scmp.ne.s32.totalorder %s91, %s94
      %p103 = scmp.eq.s32.totalorder %s27, 1
      %p104 = por %p102, %p103
      %p105 = scmp.ne.s32.totalorder %s94, %s95
      %p106 = scmp.eq.s32.totalorder %s27, 0
      %p107 = por %p105, %p106
      %p108 = scmp.ne.s32.totalorder %s94, %s95
      %p109 = scmp.eq.s32.totalorder %s28, 1
      %p110 = por %p108, %p109
      %p112 = scmp.ne.s32.totalorder %s95, %s111
      %p113 = scmp.eq.s32.totalorder %s28, 0
      %p114 = por %p112, %p113
      %s116 = sadd.s32 %s115, 1
      %p119 = scmp.eq.s32.totalorder %s22, 1
      %p120 = scmp.ne.s32.totalorder %s115, %s117
      %p121 = scmp.eq.s32.totalorder %s22, 0
      %p122 = por %p120, %p121
      %p123 = scmp.ne.s32.totalorder %s115, %s117
      %p124 = scmp.eq.s32.totalorder %s27, 1
      %p125 = por %p123, %p124
      %p126 = scmp.ne.s32.totalorder %s117, %s118
      %p127 = scmp.eq.s32.totalorder %s27, 0
      %p128 = por %p126, %p127
      %p129 = scmp.ne.s32.totalorder %s117, %s118
      %p130 = scmp.eq.s32.totalorder %s28, 1
      %p131 = por %p129, %p130
      %p133 = scmp.ne.s32.totalorder %s118, %s132
      %p134 = scmp.eq.s32.totalorder %s28, 0
      %p135 = por %p133, %p134
      %s136 = ssub.s32 %s29, %s41
      %p137 = scmp.eq.s32.totalorder %s136, 0
      %s139 = sadd.s32 %s138, 1
      %s140 = scalar_select %p137, %s138, %s139
      %p143 = pneg %p137
      %p144 = scmp.eq.s32.totalorder %s22, 1
      %p145 = por %p143, %p144
      %p146 = scmp.ne.s32.totalorder %s138, %s141
      %p147 = scmp.eq.s32.totalorder %s22, 0
      %p148 = por %p146, %p147
      %p149 = scmp.ne.s32.totalorder %s138, %s141
      %p150 = scmp.eq.s32.totalorder %s27, 1
      %p151 = por %p149, %p150
      %p152 = scmp.ne.s32.totalorder %s141, %s142
      %p153 = scmp.eq.s32.totalorder %s27, 0
      %p154 = por %p152, %p153
      %p155 = scmp.ne.s32.totalorder %s141, %s142
      %p156 = scmp.eq.s32.totalorder %s28, 1
      %p157 = por %p155, %p156
      %p159 = scmp.ne.s32.totalorder %s142, %s158
      %p160 = scmp.eq.s32.totalorder %s28, 0
      %p161 = por %p159, %p160
      %s162 = ssub.s32 %s29, %s41
      %p163 = scmp.eq.s32.totalorder %s162, 0
      %s165 = sadd.s32 %s164, 1
      %s166 = scalar_select %p163, %s164, %s165
      %p169 = pneg %p163
      %p170 = scmp.eq.s32.totalorder %s22, 1
      %p171 = por %p169, %p170
      %p172 = scmp.ne.s32.totalorder %s164, %s167
      %p173 = scmp.eq.s32.totalorder %s22, 0
      %p174 = por %p172, %p173
      %p175 = scmp.ne.s32.totalorder %s164, %s167
      %p176 = scmp.eq.s32.totalorder %s27, 1
      %p177 = por %p175, %p176
      %p178 = scmp.ne.s32.totalorder %s167, %s168
      %p179 = scmp.eq.s32.totalorder %s27, 0
      %p180 = por %p178, %p179
      %p181 = scmp.ne.s32.totalorder %s167, %s168
      %p182 = scmp.eq.s32.totalorder %s28, 1
      %p183 = por %p181, %p182
      %p185 = scmp.ne.s32.totalorder %s168, %s184
      %p186 = scmp.eq.s32.totalorder %s28, 0
      %p187 = por %p185, %p186
      %p188 = scmp.le.s32.totalorder 1, %s22
      %p189 = scmp.lt.s32.totalorder %s22, 3
      %p190 = pnand %p188, %p189
      %p191 = pneg %p190
      // Predicated region
      $region9: #{tpu_custom_call.1} parent=5 // pred_check
        _
      $region10: #{tpu_custom_call.1} parent=5 // pred_check_branch
        %193 = sbr.rel (%p190) target = $region12
      $region11: #{tpu_custom_call.1} parent=5 // pred_region
        %s194 = ssub.s32 %s22, 1
        // Predicated region
        $region13: #{tpu_custom_call.1} parent=11 // pred_check
          %p195 = pneg %p81
        $region14: #{tpu_custom_call.1} parent=11 // pred_check_branch
          %197 = sbr.rel (%p195) target = $region16
        $region15: #{tpu_custom_call.1} parent=11 // pred_region
          _
        $region16: #{tpu_custom_call.1} parent=11 // pred_fallthru
          _
        // Predicated region
        $region17: #{tpu_custom_call.1} parent=11 // pred_check
          %p198 = pneg %p107
        $region18: #{tpu_custom_call.1} parent=11 // pred_check_branch
          %200 = sbr.rel (%p198) target = $region20
        $region19: #{tpu_custom_call.1} parent=11 // pred_region
          %s201 = smul.u32 3, %s32
          %s203 = ssub.s32 384, 384
          %204 = vsyncadd [#allocation8], %s203
          %s205 = smul.addr %s201, 128
          %s206 = scalar_lea.hbm %s2, %s205
          %s207 = sshll.u32 [#allocation7], 4
          %s208 = int_to_ptr.vmem [resolvable:$true] %s207
          %213 = dma.hbm_to_vmem [thread:$0]  %s206, 384, %s208, [#allocation8], 128, 128, 8
        $region20: #{tpu_custom_call.1} parent=11 // pred_fallthru
          _
        // Predicated region
        $region21: #{tpu_custom_call.1} parent=11 // pred_check
          %p214 = pneg %p128
        $region22: #{tpu_custom_call.1} parent=11 // pred_check_branch
          %216 = sbr.rel (%p214) target = $region24
        $region23: #{tpu_custom_call.1} parent=11 // pred_region
          _
        $region24: #{tpu_custom_call.1} parent=11 // pred_fallthru
          _
      $region12: #{tpu_custom_call.1} parent=5 // pred_fallthru
        _
      %p217 = scmp.lt.s32.totalorder %s22, 2
      // Predicated region
      $region25: #{tpu_custom_call.1} parent=5 // pred_check
        %p218 = pneg %p217
      $region26: #{tpu_custom_call.1} parent=5 // pred_check_branch
        %220 = sbr.rel (%p218) target = $region28
      $region27: #{tpu_custom_call.1} parent=5 // pred_region
        // Predicated region
        $region29: #{tpu_custom_call.1} parent=27 // pred_check
          %p221 = pneg %p54
        $region30: #{tpu_custom_call.1} parent=27 // pred_check_branch
          %223 = sbr.rel (%p221) target = $region32
        $region31: #{tpu_custom_call.1} parent=27 // pred_region
          %s224 = sand.u32 %s44, 1
          %s225 = scalar_lea.sflag [#allocation5], %s224
          %s226 = sand.u32 %s44, 1
          %s227 = smul.addr %s226, 8
          %s228 = scalar_lea.vmem [#allocation4], %s227
          %s229 = smul.u32 2, %s29
          %s231 = ssub.s32 128, 128
          %232 = vsyncadd %s225, %s231
          %s233 = smul.addr %s229, 64
          %s234 = scalar_lea.hbm %s0, %s233
          %s236 = sshll.u32 %s228, 4
          %s237 = int_to_ptr.vmem [resolvable:$true] %s236
          %239 = dma.hbm_to_vmem [thread:$0]  %s234, 128, %s237, %s225
        $region32: #{tpu_custom_call.1} parent=27 // pred_fallthru
          _
      $region28: #{tpu_custom_call.1} parent=5 // pred_fallthru
        _
      %p240 = scmp.le.s32.totalorder 1, %s22
      %p241 = scmp.lt.s32.totalorder %s22, 3
      %p242 = pnand %p240, %p241
      %p243 = pneg %p242
      // Predicated region
      $region33: #{tpu_custom_call.1} parent=5 // pred_check
        _
      $region34: #{tpu_custom_call.1} parent=5 // pred_check_branch
        %245 = sbr.rel (%p242) target = $region36
      $region35: #{tpu_custom_call.1} parent=5 // pred_region
        %s246 = ssub.s32 %s22, 1
        %s247 = sand.u32 %s47, 1
        %s248 = scalar_lea.sflag [#allocation5], %s247
        %s249 = sand.u32 %s47, 1
        %s250 = smul.addr %s249, 8
        %s251 = scalar_lea.vmem [#allocation4], %s250
        // Predicated region
        $region37: #{tpu_custom_call.1} parent=35 // pred_check
          %p252 = pneg %p60
        $region38: #{tpu_custom_call.1} parent=35 // pred_check_branch
          %254 = sbr.rel (%p252) target = $region40
        $region39: #{tpu_custom_call.1} parent=35 // pred_region
          %255 = dma.done %s248, 128
        $region40: #{tpu_custom_call.1} parent=35 // pred_fallthru
          _
        // Predicated region
        $region41: #{tpu_custom_call.1} parent=35 // pred_check
          %p256 = pneg %p107
        $region42: #{tpu_custom_call.1} parent=35 // pred_check_branch
          %258 = sbr.rel (%p256) target = $region44
        $region43: #{tpu_custom_call.1} parent=35 // pred_region
          %259 = dma.done [#allocation8], 384
        $region44: #{tpu_custom_call.1} parent=35 // pred_fallthru
          _
        %s260 = sand.u32 %s47, 1
        %s261 = scalar_lea.sflag [#allocation5], %s260
        %s262 = sand.u32 %s47, 1
        %s263 = smul.addr %s262, 8
        %s264 = scalar_lea.vmem [#allocation4], %s263
        %p265 = pneg %p60
        %p266 = pneg %p57
        %p267 = pneg %p81
        %p268 = pneg %p78
        %p269 = pneg %p107
        %p270 = pneg %p104
        %p271 = pneg %p128
        %p272 = pneg %p125
        %p273 = pneg %p154
        %p274 = pneg %p151
        %s275 = sand.u32 %s141, 1
        %s276 = scalar_lea.sflag [#allocation6], %s275
        %s277 = sand.u32 %s141, 1
        %s278 = smul.addr %s277, 2
        %s279 = scalar_lea.vmem [#allocation9], %s278
        %p280 = pneg %p180
        %p281 = pneg %p177
        %s282 = sand.u32 %s167, 1
        %s283 = scalar_lea.sflag [#allocation11], %s282
        %s284 = sand.u32 %s167, 1
        %s285 = smul.addr %s284, 2
        %s286 = scalar_lea.vmem [#allocation10], %s285
        %s287 = smul.u32 2, %s31
        %s288 = smul.u32 3, %s32
        %s289 = smul.u32 2, %s31
        %s290 = smul.u32 2, %s31
        %p291 = scmp.eq.s32.totalorder %s32, 0
        // Predicated region
        $region45: #{tpu_custom_call.1} parent=35 // pred_check
          %p292 = pneg %p291
        $region46: #{tpu_custom_call.1} parent=35 // pred_check_branch
          %294 = sbr.rel (%p292) target = $region48
        $region47: #{tpu_custom_call.1} parent=35 // pred_region
          %v295 = vld [vmem:[%s251] sm:$0xff]
          %v296 = vld [vmem:[%s1] sm:$0xff]
          %v298 = vcombine.high %v295, %v295
          %vm299 = vcmask 31744
          %v301 = vsel %vm299, %v296, 0
          %vm303 = vcmask 1043456
          %v304 = vsel %vm303, %v295, 0
          %v306 = vsel %vm303, %v298, 0
          %308 = vmatprep.subr.mxu0 %v306
          %309 = vmatpush1.msra.mxu0 %v304
          %310 = vmatprep.subr.mxu0 0.0
          %311 = vmatpush1.msra.mxu0 0.0
          %312 = vmatprep.subr.mxu0 0.0
          %313 = vmatpush1.msra.mxu0 0.0
          %314 = vmatprep.subr.mxu0 0.0
          %315 = vmatpush1.msra.mxu0 0.0
          %316 = vmatprep.subr.mxu0 0.0
          %317 = vmatpush1.msra.mxu0 0.0
          %318 = vmatprep.subr.mxu0 0.0
          %319 = vmatpush1.msra.mxu0 0.0
          %320 = vmatprep.subr.mxu0 0.0
          %321 = vmatpush1.msra.mxu0 0.0
          %322 = vmatprep.subr.mxu0 0.0
          %323 = vmatpush1.msra.mxu0 0.0
          %324 = vmatprep.subr.mxu0 0.0
          %325 = vmatpush1.msra.mxu0 0.0
          %326 = vmatprep.subr.mxu0 0.0
          %327 = vmatpush1.msra.mxu0 0.0
          %328 = vmatprep.subr.mxu0 0.0
          %329 = vmatpush1.msra.mxu0 0.0
          %330 = vmatprep.subr.mxu0 0.0
          %331 = vmatpush1.msra.mxu0 0.0
          %332 = vmatprep.subr.mxu0 0.0
          %333 = vmatpush1.msra.mxu0 0.0
          %334 = vmatprep.subr.mxu0 0.0
          %335 = vmatpush1.msra.mxu0 0.0
          %336 = vmatprep.subr.mxu0 0.0
          %337 = vmatpush1.msra.mxu0 0.0
          %338 = vmatprep.subr.mxu0 0.0
          %339 = vmatpush1.msra.mxu0 0.0
          %340 = vmatprep.subr.mxu0 0.0
          %341 = vmatpush1.msra.mxu0 0.0
          %342 = vmatprep.subr.mxu0 0.0
          %343 = vmatpush1.msra.mxu0 0.0
          %344 = vmatprep.subr.mxu0 0.0
          %345 = vmatpush1.msra.mxu0 0.0
          %346 = vmatprep.subr.mxu0 0.0
          %347 = vmatpush1.msra.mxu0 0.0
          %348 = vmatprep.subr.mxu0 0.0
          %349 = vmatpush1.msra.mxu0 0.0
          %350 = vmatprep.subr.mxu0 0.0
          %351 = vmatpush1.msra.mxu0 0.0
          %352 = vmatprep.subr.mxu0 0.0
          %353 = vmatpush1.msra.mxu0 0.0
          %354 = vmatprep.subr.mxu0 0.0
          %355 = vmatpush1.msra.mxu0 0.0
          %356 = vmatprep.subr.mxu0 0.0
          %357 = vmatpush1.msra.mxu0 0.0
          %358 = vmatprep.subr.mxu0 0.0
          %359 = vmatpush1.msra.mxu0 0.0
          %360 = vmatprep.subr.mxu0 0.0
          %361 = vmatpush1.msra.mxu0 0.0
          %362 = vmatprep.subr.mxu0 0.0
          %363 = vmatpush1.msra.mxu0 0.0
          %364 = vmatprep.subr.mxu0 0.0
          %365 = vmatpush1.msra.mxu0 0.0
          %366 = vmatprep.subr.mxu0 0.0
          %367 = vmatpush1.msra.mxu0 0.0
          %368 = vmatprep.subr.mxu0 0.0
          %369 = vmatpush1.msra.mxu0 0.0
          %370 = vmatprep.subr.mxu0 0.0
          %371 = vmatpush1.msra.mxu0 0.0
          %372 = vmatprep.mubr.f32.mxu0 0.0
          %373 = vmatmul.mubr.f32.gmra.mrb[0].mxu0 %v301
          %v374 = vpop.f32.mrb[0].mxu0
          %v375 = vadd.f32 0.0, %v374
          %v376 = vpop.f32.mrb[0].mxu0
          %v377 = vadd.f32 0.0, %v376
          %378 = vdwg.mxu0
          %v379 = vmin.f32 %v375, 0.0
          %v380 = vmin.f32 %v377, 0.0
          %v381 = vmul.f32 %v379, 1.442695
          %v382 = vpow.pop %v381
          %v383 = vmul.f32 %v380, 1.442695
          %v384 = vpow.pop %v383
          %385 = vst [vmem:[#allocation2] sm:$0xff] %v382
          %386 = vst [vmem:[#allocation2 + $0x8] sm:$0xff] %v384
          %v387 = vmul.f32 %v295, 2.0408163
          %v389 = vlaneseq
          %v390 = vshrl.u32 %v389, 7
          %v391 = vsub.s32 0, %v390
          %v392 = vrot.slane %v387, %v391
          %v393 = vlaneseq
          %v394 = vshrl.u32 %v393, 7
          %v395 = vsub.s32 4, %v394
          %v396 = vrot.slane %v387, %v395
          %v399 = vlaneseq
          %v400 = vshrl.u32 %v399, 7
          %v401 = vsub.s32 0, %v400
          %v402 = vrot.slane %v392, %v401
          %v403 = vlaneseq
          %v404 = vshrl.u32 %v403, 7
          %v405 = vsub.s32 0, %v404
          %v406 = vrot.slane %v396, %v405
          %407 = vset.pattern.permute.xlu0 0
          %408 = vperm.xlu0 %407, %v296
          %v409 = vpop.permute.xlu0 %408
          %v411 = vsub.f32 %v402, %v409
          %v412 = vsub.f32 %v406, %v409
          %v413 = vmul.f32 %v382, %v411
          %v414 = vmul.f32 %v384, %v412
          %415 = vst [vmem:[#allocation2 + $0x10] sm:$0xff] %v413
          %416 = vst [vmem:[#allocation2 + $0x18] sm:$0xff] %v414
          %v417 = vlaneseq
          %v418 = vshrl.u32 %v417, 7
          %v419 = vsub.s32 1, %v418
          %v420 = vrot.slane %v387, %v419
          %v421 = vlaneseq
          %v422 = vshrl.u32 %v421, 7
          %v423 = vsub.s32 5, %v422
          %v424 = vrot.slane %v387, %v423
          %v427 = vlaneseq
          %v428 = vshrl.u32 %v427, 7
          %v429 = vsub.s32 1, %v428
          %v430 = vrot.slane %v420, %v429
          %v431 = vlaneseq
          %v432 = vshrl.u32 %v431, 7
          %v433 = vsub.s32 1, %v432
          %v434 = vrot.slane %v424, %v433
          %435 = vset.pattern.permute.xlu0 1
          %436 = vperm.xlu0 %435, %v296
          %v437 = vpop.permute.xlu0 %436
          %v439 = vsub.f32 %v430, %v437
          %v440 = vsub.f32 %v434, %v437
          %v441 = vmul.f32 %v382, %v439
          %v442 = vmul.f32 %v384, %v440
          %443 = vst [vmem:[#allocation2 + $0x20] sm:$0xff] %v441
          %444 = vst [vmem:[#allocation2 + $0x28] sm:$0xff] %v442
          %v445 = vlaneseq
          %vm446 = vcmp.ge.s32.totalorder %v445, 0
          %vm447 = vcmp.lt.s32.totalorder %v445, 256
          %vm448 = vmand %vm446, %vm447
          %449 = vst.msk [vmem:[#allocation3] sm:$0x3] %vm448, 0.0
        $region48: #{tpu_custom_call.1} parent=35 // pred_fallthru
          _
        %v450 = vld [vmem:[#allocation2] sm:$0xff]
        %v451 = vld [vmem:[#allocation2 + $0x8] sm:$0xff]
        %v452 = vld [vmem:[#allocation2 + $0x10] sm:$0xff]
        %v453 = vld [vmem:[#allocation2 + $0x18] sm:$0xff]
        %v454 = vld [vmem:[#allocation2 + $0x20] sm:$0xff]
        %v455 = vld [vmem:[#allocation2 + $0x28] sm:$0xff]
        %v456 = vld [vmem:[#allocation7] sm:$0xff]
        %v457 = vld [vmem:[#allocation7 + $0x8] sm:$0xff]
        %v458 = vld [vmem:[#allocation7 + $0x10] sm:$0xff]
        %vm459 = vcmask 195584
        %v461 = vsel %vm459, %v456, 0
        %v464 = vsel %vm459, %v457, 0
        %v467 = vsel %vm459, %v458, 0
        %469 = vmatprep.subr.mxu0 %v451
        %470 = vmatpush1.msra.mxu0 %v450
        %471 = vmatprep.subr.mxu0 %v453
        %472 = vmatpush1.msra.mxu0 %v452
        %473 = vmatprep.subr.mxu0 %v455
        %474 = vmatpush1.msra.mxu0 %v454
        %475 = vmatprep.subr.mxu0 0.0
        %476 = vmatpush1.msra.mxu0 0.0
        %477 = vmatprep.subr.mxu0 0.0
        %478 = vmatpush1.msra.mxu0 0.0
        %479 = vmatprep.subr.mxu0 0.0
        %480 = vmatpush1.msra.mxu0 0.0
        %481 = vmatprep.subr.mxu0 0.0
        %482 = vmatpush1.msra.mxu0 0.0
        %483 = vmatprep.subr.mxu0 0.0
        %484 = vmatpush1.msra.mxu0 0.0
        %485 = vmatprep.subr.mxu0 0.0
        %486 = vmatpush1.msra.mxu0 0.0
        %487 = vmatprep.subr.mxu0 0.0
        %488 = vmatpush1.msra.mxu0 0.0
        %489 = vmatprep.subr.mxu0 0.0
        %490 = vmatpush1.msra.mxu0 0.0
        %491 = vmatprep.subr.mxu0 0.0
        %492 = vmatpush1.msra.mxu0 0.0
        %493 = vmatprep.subr.mxu0 0.0
        %494 = vmatpush1.msra.mxu0 0.0
        %495 = vmatprep.subr.mxu0 0.0
        %496 = vmatpush1.msra.mxu0 0.0
        %497 = vmatprep.subr.mxu0 0.0
        %498 = vmatpush1.msra.mxu0 0.0
        %499 = vmatprep.subr.mxu0 0.0
        %500 = vmatpush1.msra.mxu0 0.0
        %501 = vmatprep.subr.mxu0 0.0
        %502 = vmatpush1.msra.mxu0 0.0
        %503 = vmatprep.subr.mxu0 0.0
        %504 = vmatpush1.msra.mxu0 0.0
        %505 = vmatprep.subr.mxu0 0.0
        %506 = vmatpush1.msra.mxu0 0.0
        %507 = vmatprep.subr.mxu0 0.0
        %508 = vmatpush1.msra.mxu0 0.0
        %509 = vmatprep.subr.mxu0 0.0
        %510 = vmatpush1.msra.mxu0 0.0
        %511 = vmatprep.subr.mxu0 0.0
        %512 = vmatpush1.msra.mxu0 0.0
        %513 = vmatprep.subr.mxu0 0.0
        %514 = vmatpush1.msra.mxu0 0.0
        %515 = vmatprep.subr.mxu0 0.0
        %516 = vmatpush1.msra.mxu0 0.0
        %517 = vmatprep.subr.mxu0 0.0
        %518 = vmatpush1.msra.mxu0 0.0
        %519 = vmatprep.subr.mxu0 0.0
        %520 = vmatpush1.msra.mxu0 0.0
        %521 = vmatprep.subr.mxu0 0.0
        %522 = vmatpush1.msra.mxu0 0.0
        %523 = vmatprep.subr.mxu0 0.0
        %524 = vmatpush1.msra.mxu0 0.0
        %525 = vmatprep.subr.mxu0 0.0
        %526 = vmatpush1.msra.mxu0 0.0
        %527 = vmatprep.subr.mxu0 0.0
        %528 = vmatpush1.msra.mxu0 0.0
        %529 = vmatprep.subr.mxu0 0.0
        %530 = vmatpush1.msra.mxu0 0.0
        %531 = vmatprep.subr.mxu0 0.0
        %532 = vmatpush1.msra.mxu0 0.0
        %533 = vmatprep.mubr.f32.mxu0 0.0
        %534 = vmatmul.mubr.f32.gmra.mrb[0].mxu0 %v461
        %v535 = vpop.f32.mrb[0].mxu0
        %v536 = vadd.f32 0.0, %v535
        %v537 = vpop.f32.mrb[0].mxu0
        %v538 = vadd.f32 0.0, %v537
        %539 = vmatprep.mubr.f32.mxu0 0.0
        %540 = vmatmul.mubr.f32.gmra.mrb[0].mxu0 %v464
        %v541 = vpop.f32.mrb[0].mxu0
        %v542 = vadd.f32 0.0, %v541
        %v543 = vpop.f32.mrb[0].mxu0
        %v544 = vadd.f32 0.0, %v543
        %545 = vmatprep.mubr.f32.mxu0 0.0
        %546 = vmatmul.mubr.f32.gmra.mrb[0].mxu0 %v467
        %v547 = vpop.f32.mrb[0].mxu0
        %v548 = vadd.f32 0.0, %v547
        %v549 = vpop.f32.mrb[0].mxu0
        %v550 = vadd.f32 0.0, %v549
        %551 = vdwg.mxu0
        %v552 = vld [vmem:[#allocation3] sm:$0x3]
        %v553 = vmul.f32 %v536, %v450
        %v554 = vmul.f32 %v538, %v451
        %v555 = vmul.f32 %v542, %v452
        %v556 = vmul.f32 %v544, %v453
        %v557 = vmul.f32 %v548, %v454
        %v558 = vmul.f32 %v550, %v455
        %v559 = vadd.f32 %v553, %v555
        %v560 = vadd.f32 %v559, %v557
        %v561 = vrot.slane %v560, 4
        %v562 = vadd.f32 %v560, %v561
        %v563 = vrot.slane %v562, 2
        %v564 = vadd.f32 %v562, %v563
        %v565 = vrot.slane %v564, 1
        %v566 = vadd.f32 %v564, %v565
        %v567 = vadd.f32 %v554, %v556
        %v568 = vadd.f32 %v567, %v558
        %v569 = vrot.slane %v568, 4
        %v570 = vadd.f32 %v568, %v569
        %v571 = vrot.slane %v570, 2
        %v572 = vadd.f32 %v570, %v571
        %v573 = vrot.slane %v572, 1
        %v574 = vadd.f32 %v572, %v573
        %v577 = vcombine.low %v566, %v574
        %v579 = vunpack.c.l.s4 1966171168
        %v580 = vunpack.c.0.s8 %v579
        %v581 = vlaneseq
        %v582 = vshrl.u32 %v581, 7
        %v583 = vsub.s32 %v580, %v582
        %v584 = vrot.slane %v577, %v583
        %v586 = vunpack.c.l.s4 1966171168
        %v587 = vunpack.c.0.s8 %v586
        %v588 = vlaneseq
        %v589 = vshrl.u32 %v588, 7
        %v590 = vsub.s32 %v587, %v589
        %v591 = vrot.slane %v584, %v590
        %v593 = vadd.f32 %v552, %v591
        %v594 = vlaneseq
        %vm595 = vcmp.ge.s32.totalorder %v594, 0
        %vm596 = vcmp.lt.s32.totalorder %v594, 256
        %vm597 = vmand %vm595, %vm596
        %598 = vst.msk [vmem:[#allocation3] sm:$0x3] %vm597, %v593
        // Predicated region
        $region49: #{tpu_custom_call.1} parent=35 // pred_check
          %p599 = pneg %p291
        $region50: #{tpu_custom_call.1} parent=35 // pred_check_branch
          %601 = sbr.rel (%p599) target = $region52
        $region51: #{tpu_custom_call.1} parent=35 // pred_region
          %v602 = vld [vmem:[%s3] sm:$0x1]
          %v603 = vld [vmem:[#allocation2] sm:$0xff]
          %v604 = vld [vmem:[#allocation2 + $0x8] sm:$0xff]
          %v605 = vld [vmem:[#allocation2 + $0x10] sm:$0xff]
          %v606 = vld [vmem:[#allocation2 + $0x18] sm:$0xff]
          %v607 = vld [vmem:[#allocation2 + $0x20] sm:$0xff]
          %v608 = vld [vmem:[#allocation2 + $0x28] sm:$0xff]
          %v610 = vsel %vm459, %v602, 0
          %612 = vmatprep.subr.mxu0 %v604
          %613 = vmatpush1.msra.mxu0 %v603
          %614 = vmatprep.subr.mxu0 %v606
          %615 = vmatpush1.msra.mxu0 %v605
          %616 = vmatprep.subr.mxu0 %v608
          %617 = vmatpush1.msra.mxu0 %v607
          %618 = vmatprep.subr.mxu0 0.0
          %619 = vmatpush1.msra.mxu0 0.0
          %620 = vmatprep.subr.mxu0 0.0
          %621 = vmatpush1.msra.mxu0 0.0
          %622 = vmatprep.subr.mxu0 0.0
          %623 = vmatpush1.msra.mxu0 0.0
          %624 = vmatprep.subr.mxu0 0.0
          %625 = vmatpush1.msra.mxu0 0.0
          %626 = vmatprep.subr.mxu0 0.0
          %627 = vmatpush1.msra.mxu0 0.0
          %628 = vmatprep.subr.mxu0 0.0
          %629 = vmatpush1.msra.mxu0 0.0
          %630 = vmatprep.subr.mxu0 0.0
          %631 = vmatpush1.msra.mxu0 0.0
          %632 = vmatprep.subr.mxu0 0.0
          %633 = vmatpush1.msra.mxu0 0.0
          %634 = vmatprep.subr.mxu0 0.0
          %635 = vmatpush1.msra.mxu0 0.0
          %636 = vmatprep.subr.mxu0 0.0
          %637 = vmatpush1.msra.mxu0 0.0
          %638 = vmatprep.subr.mxu0 0.0
          %639 = vmatpush1.msra.mxu0 0.0
          %640 = vmatprep.subr.mxu0 0.0
          %641 = vmatpush1.msra.mxu0 0.0
          %642 = vmatprep.subr.mxu0 0.0
          %643 = vmatpush1.msra.mxu0 0.0
          %644 = vmatprep.subr.mxu0 0.0
          %645 = vmatpush1.msra.mxu0 0.0
          %646 = vmatprep.subr.mxu0 0.0
          %647 = vmatpush1.msra.mxu0 0.0
          %648 = vmatprep.subr.mxu0 0.0
          %649 = vmatpush1.msra.mxu0 0.0
          %650 = vmatprep.subr.mxu0 0.0
          %651 = vmatpush1.msra.mxu0 0.0
          %652 = vmatprep.subr.mxu0 0.0
          %653 = vmatpush1.msra.mxu0 0.0
          %654 = vmatprep.subr.mxu0 0.0
          %655 = vmatpush1.msra.mxu0 0.0
          %656 = vmatprep.subr.mxu0 0.0
          %657 = vmatpush1.msra.mxu0 0.0
          %658 = vmatprep.subr.mxu0 0.0
          %659 = vmatpush1.msra.mxu0 0.0
          %660 = vmatprep.subr.mxu0 0.0
          %661 = vmatpush1.msra.mxu0 0.0
          %662 = vmatprep.subr.mxu0 0.0
          %663 = vmatpush1.msra.mxu0 0.0
          %664 = vmatprep.subr.mxu0 0.0
          %665 = vmatpush1.msra.mxu0 0.0
          %666 = vmatprep.subr.mxu0 0.0
          %667 = vmatpush1.msra.mxu0 0.0
          %668 = vmatprep.subr.mxu0 0.0
          %669 = vmatpush1.msra.mxu0 0.0
          %670 = vmatprep.subr.mxu0 0.0
          %671 = vmatpush1.msra.mxu0 0.0
          %672 = vmatprep.subr.mxu0 0.0
          %673 = vmatpush1.msra.mxu0 0.0
          %674 = vmatprep.subr.mxu0 0.0
          %675 = vmatpush1.msra.mxu0 0.0
          %676 = vmatprep.mubr.f32.mxu0 0.0
          %677 = vmatmul.mubr.f32.gmra.mrb[0].mxu0 %v610
          %v678 = vpop.f32.mrb[0].mxu0
          %v679 = vadd.f32 0.0, %v678
          %v680 = vpop.f32.mrb[0].mxu0
          %v681 = vadd.f32 0.0, %v680
          %682 = vdwg.mxu0
          %v685 = vcombine.low %v679, %v681
          %v687 = vunpack.c.l.s4 1966171168
          %v688 = vunpack.c.0.s8 %v687
          %v689 = vlaneseq
          %v690 = vshrl.u32 %v689, 7
          %v691 = vsub.s32 %v688, %v690
          %v692 = vrot.slane %v685, %v691
          %v694 = vunpack.c.l.s4 1966171168
          %v695 = vunpack.c.0.s8 %v694
          %v696 = vlaneseq
          %v697 = vshrl.u32 %v696, 7
          %v698 = vsub.s32 %v695, %v697
          %v699 = vrot.slane %v692, %v698
          %701 = vst.msk [vmem:[%s279] sm:$0x3] %vm597, %v699
          %v702 = vld [vmem:[#allocation3] sm:$0x3]
          %v703 = vsub.f32 1.0, %v702
          %v704 = vmax.f32 %v703, 0.0
          %705 = vst.msk [vmem:[%s286] sm:$0x3] %vm597, %v704
        $region52: #{tpu_custom_call.1} parent=35 // pred_fallthru
          _
        %s706 = sand.u32 %s141, 1
        %s707 = scalar_lea.sflag [#allocation6], %s706
        %s708 = sand.u32 %s141, 1
        %s709 = smul.addr %s708, 2
        %s710 = scalar_lea.vmem [#allocation9], %s709
        %s711 = sand.u32 %s167, 1
        %s712 = scalar_lea.sflag [#allocation11], %s711
        %s713 = sand.u32 %s167, 1
        %s714 = smul.addr %s713, 2
        %s715 = scalar_lea.vmem [#allocation10], %s714
        // Predicated region
        $region53: #{tpu_custom_call.1} parent=35 // pred_check
          %p716 = pneg %p151
        $region54: #{tpu_custom_call.1} parent=35 // pred_check_branch
          %718 = sbr.rel (%p716) target = $region56
        $region55: #{tpu_custom_call.1} parent=35 // pred_region
          %s719 = smul.u32 2, %s31
          %s721 = ssub.s32 32, 32
          %722 = vsyncadd %s707, %s721
          %s723 = smul.addr %s719, 16
          %s724 = scalar_lea.hbm %s4, %s723
          %s726 = sshll.u32 %s710, 4
          %s727 = int_to_ptr.vmem [resolvable:$true] %s726
          %729 = dma.vmem_to_hbm [thread:$0]  %s727, 32, %s724, %s707
        $region56: #{tpu_custom_call.1} parent=35 // pred_fallthru
          _
        // Predicated region
        $region57: #{tpu_custom_call.1} parent=35 // pred_check
          %p730 = pneg %p177
        $region58: #{tpu_custom_call.1} parent=35 // pred_check_branch
          %732 = sbr.rel (%p730) target = $region60
        $region59: #{tpu_custom_call.1} parent=35 // pred_region
          %s733 = smul.u32 2, %s31
          %s735 = ssub.s32 32, 32
          %736 = vsyncadd %s712, %s735
          %s737 = smul.addr %s733, 16
          %s738 = scalar_lea.hbm %s5, %s737
          %s740 = sshll.u32 %s715, 4
          %s741 = int_to_ptr.vmem [resolvable:$true] %s740
          %743 = dma.vmem_to_hbm [thread:$0]  %s741, 32, %s738, %s712
        $region60: #{tpu_custom_call.1} parent=35 // pred_fallthru
          _
      $region36: #{tpu_custom_call.1} parent=5 // pred_fallthru
        _
      %p744 = scmp.le.s32.totalorder 2, %s22
      // Predicated region
      $region61: #{tpu_custom_call.1} parent=5 // pred_check
        %p745 = pneg %p744
      $region62: #{tpu_custom_call.1} parent=5 // pred_check_branch
        %747 = sbr.rel (%p745) target = $region64
      $region63: #{tpu_custom_call.1} parent=5 // pred_region
        %s748 = ssub.s32 %s22, 2
        // Predicated region
        $region65: #{tpu_custom_call.1} parent=63 // pred_check
          %p749 = pneg %p157
        $region66: #{tpu_custom_call.1} parent=63 // pred_check_branch
          %751 = sbr.rel (%p749) target = $region68
        $region67: #{tpu_custom_call.1} parent=63 // pred_region
          %s752 = sand.u32 %s142, 1
          %s753 = scalar_lea.sflag [#allocation6], %s752
          %s754 = sand.u32 %s142, 1
          %s755 = smul.addr %s754, 2
          %s756 = scalar_lea.vmem [#allocation9], %s755
          %757 = dma.done %s753, 32
        $region68: #{tpu_custom_call.1} parent=63 // pred_fallthru
          _
        // Predicated region
        $region69: #{tpu_custom_call.1} parent=63 // pred_check
          %p758 = pneg %p183
        $region70: #{tpu_custom_call.1} parent=63 // pred_check_branch
          %760 = sbr.rel (%p758) target = $region72
        $region71: #{tpu_custom_call.1} parent=63 // pred_region
          %s761 = sand.u32 %s168, 1
          %s762 = scalar_lea.sflag [#allocation11], %s761
          %s763 = sand.u32 %s168, 1
          %s764 = smul.addr %s763, 2
          %s765 = scalar_lea.vmem [#allocation10], %s764
          %766 = dma.done %s762, 32
        $region72: #{tpu_custom_call.1} parent=63 // pred_fallthru
          _
      $region64: #{tpu_custom_call.1} parent=5 // pred_fallthru
        _
    $region6: #{tpu_custom_call.1} parent=1 // loop_footer
      %s26 = sadd.s32 1, %s22
    $region7: #{tpu_custom_call.1} parent=1 // loop_footer_branch
      %21 = sbr.rel target = $region3
    $region8: #{tpu_custom_call.1} parent=1 // loop_exit
      _
    %767 = vsyncpa [#allocation5], 1
    %s768 = scalar_lea.sflag [#allocation5], 1
    %769 = vsyncpa %s768, 1
    %770 = vsyncpa [#allocation8], 1
    %771 = vsyncpa [#allocation6], 1
    %s772 = scalar_lea.sflag [#allocation6], 1
    %773 = vsyncpa %s772, 1
    %774 = vsyncpa [#allocation11], 1
    %s775 = scalar_lea.sflag [#allocation11], 1
    %776 = vsyncpa %s775, 1

</llo_original>
